<compile_context>
chip_gen: v6e
topology: v6e:2x2x1
jax: 0.10.0
libtpu: 0.0.40
codegen_flags: <defaults>
</compile_context>

<pallas_src>
import jax
import jax.numpy as jnp
import numpy as np
from jax.experimental import pallas as pl
from jax.experimental.pallas import tpu as pltpu


def _gat_head_kernel(h_ref, adj_ref, w_big_ref, out_ref):
    """One GAT head per grid step.  Block shapes: h [N,Fin], adj [N,N] (dst,src),
    w_big [1,Fin,2F+2] = [W_self | W_func | W_func@a_src | W_func@a_dst], out [1,N,F]."""
    f = out_ref.shape[-1]                               # Fout

    h = h_ref[...].astype(jnp.float32)                  # [N, Fin]
    mask = adj_ref[...] != 0                            # [N, N] bool, computed once
    w_big = w_big_ref[0].astype(jnp.float32)            # [Fin, 2F+2]

    # Single fused MXU pass:  columns = [h_s | z | s_src | s_dst]
    fused = jnp.dot(h, w_big, preferred_element_type=jnp.float32)   # [N, 2F+2]
    h_s = fused[:, 0:f]                                  # [N, F]
    z = fused[:, f:2 * f]                                # [N, F]
    s_src = fused[:, 2 * f:2 * f + 1]                    # [N, 1]  z_j . a_src
    s_dst = fused[:, 2 * f + 1:2 * f + 2]                # [N, 1]  z_i . a_dst

    # Edge logits e[i, j] = leaky_relu(s_src[j] + s_dst[i]).
    # (The [N,1]->[1,N] move is a tiny XLU op at these sizes.)
    e = s_dst + s_src.T                                  # [N, N]
    e = jnp.where(e > 0, e, 0.01 * e)                    # leaky_relu, slope 0.01

    # Masked softmax over incoming edges (axis=-1 = source nodes).
    neg_inf = jnp.float32(-1e30)
    e = jnp.where(mask, e, neg_inf)
    m = jnp.max(e, axis=-1, keepdims=True)
    p = jnp.where(mask, jnp.exp(e - m), 0.0)
    denom = jnp.sum(p, axis=-1, keepdims=True)           # >= 1 (self-loop), approx ok
    alpha = p * pl.reciprocal(denom, approx=True)        # [N, N]

    # Aggregate neighbor messages, self term, ReLU, residual.
    h_agg = jnp.dot(alpha, z, preferred_element_type=jnp.float32)   # [N, F]
    h_new = jnp.maximum(h_s + h_agg, 0.0)
    out_ref[0] = (h + h_new).astype(out_ref.dtype)


def build_fused_weights(w_self, w_func, a_src, a_dst):
    """w_self, w_func: [H, Fin, Fout] (pre-transposed); a_src, a_dst: [H, Fout, 1].
    Returns W_big [H, Fin, 2*Fout + 2]."""
    s_src_w = jnp.einsum("hif,hfo->hio", w_func, a_src)   # [H, Fin, 1]
    s_dst_w = jnp.einsum("hif,hfo->hio", w_func, a_dst)   # [H, Fin, 1]
    return jnp.concatenate([w_self, w_func, s_src_w, s_dst_w], axis=-1)


def multihead_gat_pallas(h, adj_i8, w_big):
    n, fin = h.shape
    n_heads, fin_w, c = w_big.shape
    assert fin_w == fin
    fout = (c - 2) // 2
    assert fin == fout, "residual connection requires in_feats == out_feats"

    per_head = pl.pallas_call(
        _gat_head_kernel,
        out_shape=jax.ShapeDtypeStruct((n_heads, n, fout), h.dtype),
        grid=(n_heads,),
        in_specs=[
            pl.BlockSpec((n, fin), lambda hh: (0, 0)),        # node features (shared)
            pl.BlockSpec((n, n), lambda hh: (0, 0)),          # int8 adjacency (shared)
            pl.BlockSpec((1, fin, c), lambda hh: (hh, 0, 0)),  # fused weights, per head
        ],
        out_specs=pl.BlockSpec((1, n, fout), lambda hh: (hh, 0, 0)),
        compiler_params=pltpu.CompilerParams(
            dimension_semantics=("parallel",)),               # heads across TCs on v7x
    )(h, adj_i8, w_big)

    # merge='cat' -> [N, H*Fout]; lane-dense slab (H*Fout = 128 at demo sizes).
    return per_head.transpose(1, 0, 2).reshape(n, n_heads * fout)


def multihead_gat_ref(h, adj, w_self, w_func, a_src, a_dst):
    """Pure-JAX reference (same math as the PyTorch module, eval mode)."""
    hf = h.astype(jnp.float32)
    mask = adj != 0
    outs = []
    for k in range(w_self.shape[0]):
        h_s = hf @ w_self[k]
        z = hf @ w_func[k]
        e = (z @ a_dst[k]) + (z @ a_src[k]).T
        e = jnp.where(e > 0, e, 0.01 * e)
        e = jnp.where(mask, e, -1e30)
        m = jnp.max(e, axis=-1, keepdims=True)
        p = jnp.where(mask, jnp.exp(e - m), 0.0)
        alpha = p / jnp.sum(p, axis=-1, keepdims=True)
        h_new = jnp.maximum(h_s + alpha @ z, 0.0)
        outs.append((hf + h_new).astype(h.dtype))
    return jnp.concatenate(outs, axis=1)


if __name__ == "__main__":
    key = jax.random.PRNGKey(0)
    N = 8            # number of graph nodes
    in_feats = 32
    out_feats = 32   # == in_feats so the residual connection is valid
    num_heads = 4    # merge='cat' -> output width 128 (lane-dense)

    k_h, k_ws, k_wf, k_att, k_adj = jax.random.split(key, 5)

    h = jax.random.normal(k_h, (N, in_feats), dtype=jnp.float32)

    # Kaiming-normal-style init (fan_in mode), one set of weights per head.
    std_lin = np.sqrt(2.0 / in_feats)
    w_self = std_lin * jax.random.normal(
        k_ws, (num_heads, in_feats, out_feats), jnp.float32)
    w_func = std_lin * jax.random.normal(
        k_wf, (num_heads, in_feats, out_feats), jnp.float32)
    std_att = np.sqrt(2.0 / (1.0 + 0.02 ** 2) / (2 * out_feats))
    att_w = std_att * jax.random.normal(
        k_att, (num_heads, 2 * out_feats, 1), jnp.float32)
    a_src = att_w[:, :out_feats, :]      # multiplies edges.src['z']
    a_dst = att_w[:, out_feats:, :]      # multiplies edges.dst['z']

    # Random sparse adjacency + self-loops, stored as int8 (adj[i, j]=1 means edge j->i).
    adj_f = (jax.random.uniform(k_adj, (N, N)) < 0.5).astype(jnp.float32)
    adj_f = jnp.maximum(adj_f, jnp.eye(N, dtype=jnp.float32))
    adj_i8 = adj_f.astype(jnp.int8)

    w_big = build_fused_weights(w_self, w_func, a_src, a_dst)   # [H, Fin, 2F+2]

    out = multihead_gat_pallas(h, adj_i8, w_big)
    out = jax.block_until_ready(out)

    ref = multihead_gat_ref(h, adj_f, w_self, w_func, a_src, a_dst)
    # approx reciprocal in the kernel softmax -> allow ~1e-3 level differences.
    np.testing.assert_allclose(np.asarray(out), np.asarray(ref),
                               rtol=5e-3, atol=5e-3)
    print("KERNEL_OK")
</pallas_src>

<mosaic_0001>
module attributes {stable_mosaic.version = 11 : i64} {
  func.func @_gat_head_kernel(%arg0: i32, %arg1: memref<8x32xf32, #tpu.memory_space<vmem>>, %arg2: memref<8x8xi8, #tpu.memory_space<vmem>>, %arg3: memref<1x32x66xf32, #tpu.memory_space<vmem>>, %arg4: memref<1x8x32xf32, #tpu.memory_space<vmem>>) attributes {dimension_semantics = [#tpu.dimension_semantics<parallel>], iteration_bounds = array<i64: 4>, scalar_prefetch = 0 : i64, scratch_operands = 0 : i64, tpu.core_type = #tpu.core_type<tc>, window_params = [{pipeline_mode = #tpu.pipeline_mode<synchronous>, transform_indices = @transform_0, window_bounds = array<i64: 8, 32>}, {pipeline_mode = #tpu.pipeline_mode<synchronous>, transform_indices = @transform_1, window_bounds = array<i64: 8, 8>}, {transform_indices = @transform_2, window_bounds = array<i64: 1, 32, 66>}, {transform_indices = @transform_3, window_bounds = array<i64: 1, 8, 32>}]} {
    %c0 = arith.constant 0 : index
    %c0_0 = arith.constant 0 : index
    %0 = vector.load %arg1[%c0, %c0_0] : memref<8x32xf32, #tpu.memory_space<vmem>>, vector<8x32xf32>
    %c0_1 = arith.constant 0 : index
    %c0_2 = arith.constant 0 : index
    %1 = vector.load %arg2[%c0_1, %c0_2] : memref<8x8xi8, #tpu.memory_space<vmem>>, vector<8x8xi8>
    %c0_i8 = arith.constant 0 : i8
    %2 = vector.broadcast %c0_i8 : i8 to vector<8x8xi8>
    %3 = arith.cmpi ne, %1, %2 : vector<8x8xi8>
    %c0_3 = arith.constant 0 : index
    %c0_4 = arith.constant 0 : index
    %c0_5 = arith.constant 0 : index
    %4 = vector.load %arg3[%c0_3, %c0_4, %c0_5] : memref<1x32x66xf32, #tpu.memory_space<vmem>>, vector<1x32x66xf32>
    %5 = vector.shape_cast %4 : vector<1x32x66xf32> to vector<32x66xf32>
    %cst = arith.constant dense<0.000000e+00> : vector<8x66xf32>
    %6 = tpu.matmul %0, %5, %cst {dimension_numbers = #tpu.dot_dimension_numbers<[1], [0], [0], [1], [0, 0, 1, 1], [], []>} : vector<8x32xf32>, vector<32x66xf32>, vector<8x66xf32> -> vector<8x66xf32>
    %7 = vector.extract_strided_slice %6 {offsets = [0, 0], sizes = [8, 32], strides = [1, 1]} : vector<8x66xf32> to vector<8x32xf32>
    %8 = vector.extract_strided_slice %6 {offsets = [0, 32], sizes = [8, 32], strides = [1, 1]} : vector<8x66xf32> to vector<8x32xf32>
    %9 = vector.extract_strided_slice %6 {offsets = [0, 64], sizes = [8, 1], strides = [1, 1]} : vector<8x66xf32> to vector<8x1xf32>
    %10 = vector.extract_strided_slice %6 {offsets = [0, 65], sizes = [8, 1], strides = [1, 1]} : vector<8x66xf32> to vector<8x1xf32>
    %11 = tpu.transpose %9, [1, 0] : vector<8x1xf32> -> vector<1x8xf32>
    %12 = vector.broadcast %10 : vector<8x1xf32> to vector<8x8xf32>
    %13 = vector.broadcast %11 : vector<1x8xf32> to vector<8x8xf32>
    %14 = arith.addf %12, %13 : vector<8x8xf32>
    %cst_6 = arith.constant 0.000000e+00 : f32
    %15 = vector.broadcast %cst_6 : f32 to vector<8x8xf32>
    %16 = arith.cmpf ogt, %14, %15 : vector<8x8xf32>
    %cst_7 = arith.constant 0.00999999977 : f32
    %17 = vector.broadcast %cst_7 : f32 to vector<8x8xf32>
    %18 = arith.mulf %17, %14 : vector<8x8xf32>
    %19 = arith.select %16, %14, %18 : vector<8x8xi1>, vector<8x8xf32>
    %cst_8 = arith.constant -1.000000e+30 : f32
    %20 = vector.broadcast %cst_8 : f32 to vector<8x8xf32>
    %21 = arith.select %3, %19, %20 : vector<8x8xi1>, vector<8x8xf32>
    %cst_9 = arith.constant dense<0xFF800000> : vector<8xf32>
    %22 = vector.multi_reduction <maximumf>, %21, %cst_9 [1] : vector<8x8xf32> to vector<8xf32>
    %23 = vector.shape_cast %22 : vector<8xf32> to vector<8x1xf32>
    %24 = vector.broadcast %23 : vector<8x1xf32> to vector<8x8xf32>
    %25 = arith.subf %21, %24 : vector<8x8xf32>
    %26 = math.exp %25 : vector<8x8xf32>
    %cst_10 = arith.constant 0.000000e+00 : f32
    %27 = vector.broadcast %cst_10 : f32 to vector<8x8xf32>
    %28 = arith.select %3, %26, %27 : vector<8x8xi1>, vector<8x8xf32>
    %cst_11 = arith.constant dense<0.000000e+00> : vector<8xf32>
    %29 = vector.multi_reduction <add>, %28, %cst_11 [1] : vector<8x8xf32> to vector<8xf32>
    %30 = vector.shape_cast %29 : vector<8xf32> to vector<8x1xf32>
    %31 = tpu.reciprocal %30 {approx = true} : vector<8x1xf32> -> vector<8x1xf32>
    %32 = vector.broadcast %31 : vector<8x1xf32> to vector<8x8xf32>
    %33 = arith.mulf %28, %32 : vector<8x8xf32>
    %cst_12 = arith.constant dense<0.000000e+00> : vector<8x32xf32>
    %34 = tpu.matmul %33, %8, %cst_12 {dimension_numbers = #tpu.dot_dimension_numbers<[1], [0], [0], [1], [0, 0, 1, 1], [], []>} : vector<8x8xf32>, vector<8x32xf32>, vector<8x32xf32> -> vector<8x32xf32>
    %35 = arith.addf %7, %34 : vector<8x32xf32>
    %cst_13 = arith.constant 0.000000e+00 : f32
    %36 = vector.broadcast %cst_13 : f32 to vector<8x32xf32>
    %37 = arith.maximumf %35, %36 : vector<8x32xf32>
    %38 = arith.addf %0, %37 : vector<8x32xf32>
    %c0_14 = arith.constant 0 : index
    %c0_15 = arith.constant 0 : index
    %c0_16 = arith.constant 0 : index
    %39 = vector.load %arg4[%c0_14, %c0_15, %c0_16] : memref<1x8x32xf32, #tpu.memory_space<vmem>>, vector<1x8x32xf32>
    %40 = vector.shape_cast %39 : vector<1x8x32xf32> to vector<8x32xf32>
    %41 = vector.shape_cast %38 : vector<8x32xf32> to vector<1x8x32xf32>
    tpu.vector_store %arg4[%c0_14, %c0_15, %c0_16], %41 {strides = array<i32>} : memref<1x8x32xf32, #tpu.memory_space<vmem>>, vector<1x8x32xf32>,
    return
  }
  func.func @transform_0(%arg0: i32) -> (i32, i32) {
    %c0_i32 = arith.constant 0 : i32
    %c0_i32_0 = arith.constant 0 : i32
    %c0_i32_1 = arith.constant 0 : i32
    return %c0_i32, %c0_i32_0 : i32, i32
  }
  func.func @transform_1(%arg0: i32) -> (i32, i32) {
    %c0_i32 = arith.constant 0 : i32
    %c0_i32_0 = arith.constant 0 : i32
    %c0_i32_1 = arith.constant 0 : i32
    return %c0_i32, %c0_i32_0 : i32, i32
  }
  func.func @transform_2(%arg0: i32) -> (i32, i32, i32) {
    %c0_i32 = arith.constant 0 : i32
    %c0_i32_0 = arith.constant 0 : i32
    %c0_i32_1 = arith.constant 0 : i32
    return %arg0, %c0_i32, %c0_i32_0 : i32, i32, i32
  }
  func.func @transform_3(%arg0: i32) -> (i32, i32, i32) {
    %c0_i32 = arith.constant 0 : i32
    %c0_i32_0 = arith.constant 0 : i32
    %c0_i32_1 = arith.constant 0 : i32
    return %arg0, %c0_i32, %c0_i32_0 : i32, i32, i32
  }
}

</mosaic_0001>

<llo_original>
// kernel: tpu_custom_call.1
$region0: #{tpu_custom_call.1}
  #allocation0 [shape = 'u32[]', space=smem, size = 0x4, offset = 0x4, fixed_abs, tag = 'smem constant byte address 0x4 - core index']
  #allocation1 [shape = 'u32[144,128]{1,0:T(1,128)}', space=vmem, size = 0x12000, scoped, tag = 'internal scratch']
  %s0 = inlined_call_operand.hbm [shape: f32[8,32], index: 0, kind: input, shape index: {}]
  %s1 = inlined_call_operand.hbm [shape: s8[8,8], index: 1, kind: input, shape index: {}]
  %s2 = inlined_call_operand.hbm [shape: f32[4,32,66], index: 2, kind: input, shape index: {}]
  %s3 = inlined_call_operand.hbm [shape: f32[4,8,32], index: 3, kind: output, shape index: {}]
  %s4 = sld [smem:[#allocation0]]
  $region57: #{tpu_custom_call.1} parent=0
    _
  %s6 = ssub.s32 1, %s4
  %s7 = scalar_select 0, %s6, %s4
  $region1: #{tpu_custom_call.1} parent=0
    #allocation2 [shape = 'u8[4096]{0}', space=vmem, size = 0x1000, scoped, tag = 'input window, operand 0, single buffered']
    #allocation3 [shape = 's32[2]{0}', space=sflag, size = 0x8, scoped, tag = 'scoped memory for tpu_custom_call.1']
    #allocation4 [shape = 's32[2]{0}', space=sflag, size = 0x8, scoped, tag = 'scoped memory for tpu_custom_call.1']
    #allocation5 [shape = 'u8[1024]{0}', space=vmem, size = 0x400, scoped, tag = 'input window, operand 1, single buffered']
    #allocation6 [shape = 's32[1]{0}', space=sflag, size = 0x4, scoped, tag = 'scoped memory for tpu_custom_call.1']
    #allocation7 [shape = 'u8[32768]{0}', space=vmem, size = 0x8000, scoped, tag = 'input window, operand 2']
    #allocation8 [shape = 'u8[8192]{0}', space=vmem, size = 0x2000, scoped, tag = 'output window, operand 0']
    %8 = vsyncpa [#allocation3], 0
    %9 = vsyncpa [#allocation6], 0
    %10 = vsyncpa [#allocation4], 0
    %s11 = scalar_lea.sflag [#allocation4], 1
    %12 = vsyncpa %s11, 0
    loop: start=0, step=1, limit=6
    $region2: #{tpu_custom_call.1} parent=1 // loop_pre_header
      _
    $region3: #{tpu_custom_call.1} parent=1 // loop_header
      %s14 = sphi 0, %s18
      %p15 = scmp.ge.s32.totalorder %s14, 6
      %s22 = sphi 0, %s22
      %s24 = sphi 0, %s22
      %s25 = sphi 0, %s24
      %s39 = sphi 0, %s25
      %s43 = sphi 0, %s43
      %s45 = sphi 0, %s43
      %s46 = sphi 0, %s45
      %s60 = sphi 0, %s46
      %s66 = sphi 0, %s68
      %s69 = sphi 0, %s66
      %s70 = sphi 0, %s69
      %s86 = sphi 0, %s70
      %s92 = sphi 0, %s94
      %s95 = sphi 0, %s92
      %s96 = sphi 0, %s95
      %s112 = sphi 0, %s96
    $region4: #{tpu_custom_call.1} parent=1 // loop_header_branch
      %17 = sbr.rel (%p15) target = $region8
    $region5: #{tpu_custom_call.1} parent=1 // loop_body
      %s19 = ssub.s32 %s14, 1
      %s20 = ssub.s32 %s14, 2
      %s21 = sadd.s32 %s14, 1
      %s23 = sadd.s32 %s22, 1
      %p26 = scmp.eq.s32.totalorder %s14, 3
      %p27 = scmp.ne.s32.totalorder %s22, %s24
      %p28 = scmp.eq.s32.totalorder %s14, 0
      %p29 = por %p27, %p28
      %p30 = scmp.ne.s32.totalorder %s22, %s24
      %p31 = scmp.eq.s32.totalorder %s19, 3
      %p32 = por %p30, %p31
      %p33 = scmp.ne.s32.totalorder %s24, %s25
      %p34 = scmp.eq.s32.totalorder %s19, 0
      %p35 = por %p33, %p34
      %p36 = scmp.ne.s32.totalorder %s24, %s25
      %p37 = scmp.eq.s32.totalorder %s20, 3
      %p38 = por %p36, %p37
      %p40 = scmp.ne.s32.totalorder %s25, %s39
      %p41 = scmp.eq.s32.totalorder %s20, 0
      %p42 = por %p40, %p41
      %s44 = sadd.s32 %s43, 1
      %p47 = scmp.eq.s32.totalorder %s14, 3
      %p48 = scmp.ne.s32.totalorder %s43, %s45
      %p49 = scmp.eq.s32.totalorder %s14, 0
      %p50 = por %p48, %p49
      %p51 = scmp.ne.s32.totalorder %s43, %s45
      %p52 = scmp.eq.s32.totalorder %s19, 3
      %p53 = por %p51, %p52
      %p54 = scmp.ne.s32.totalorder %s45, %s46
      %p55 = scmp.eq.s32.totalorder %s19, 0
      %p56 = por %p54, %p55
      %p57 = scmp.ne.s32.totalorder %s45, %s46
      %p58 = scmp.eq.s32.totalorder %s20, 3
      %p59 = por %p57, %p58
      %p61 = scmp.ne.s32.totalorder %s46, %s60
      %p62 = scmp.eq.s32.totalorder %s20, 0
      %p63 = por %p61, %p62
      %s64 = ssub.s32 %s14, %s21
      %p65 = scmp.eq.s32.totalorder %s64, 0
      %s67 = sadd.s32 %s66, 1
      %s68 = scalar_select %p65, %s66, %s67
      %p71 = pneg %p65
      %p72 = scmp.eq.s32.totalorder %s14, 3
      %p73 = por %p71, %p72
      %p74 = scmp.ne.s32.totalorder %s66, %s69
      %p75 = scmp.eq.s32.totalorder %s14, 0
      %p76 = por %p74, %p75
      %p77 = scmp.ne.s32.totalorder %s66, %s69
      %p78 = scmp.eq.s32.totalorder %s19, 3
      %p79 = por %p77, %p78
      %p80 = scmp.ne.s32.totalorder %s69, %s70
      %p81 = scmp.eq.s32.totalorder %s19, 0
      %p82 = por %p80, %p81
      %p83 = scmp.ne.s32.totalorder %s69, %s70
      %p84 = scmp.eq.s32.totalorder %s20, 3
      %p85 = por %p83, %p84
      %p87 = scmp.ne.s32.totalorder %s70, %s86
      %p88 = scmp.eq.s32.totalorder %s20, 0
      %p89 = por %p87, %p88
      %s90 = ssub.s32 %s14, %s21
      %p91 = scmp.eq.s32.totalorder %s90, 0
      %s93 = sadd.s32 %s92, 1
      %s94 = scalar_select %p91, %s92, %s93
      %p97 = pneg %p91
      %p98 = scmp.eq.s32.totalorder %s14, 3
      %p99 = por %p97, %p98
      %p100 = scmp.ne.s32.totalorder %s92, %s95
      %p101 = scmp.eq.s32.totalorder %s14, 0
      %p102 = por %p100, %p101
      %p103 = scmp.ne.s32.totalorder %s92, %s95
      %p104 = scmp.eq.s32.totalorder %s19, 3
      %p105 = por %p103, %p104
      %p106 = scmp.ne.s32.totalorder %s95, %s96
      %p107 = scmp.eq.s32.totalorder %s19, 0
      %p108 = por %p106, %p107
      %p109 = scmp.ne.s32.totalorder %s95, %s96
      %p110 = scmp.eq.s32.totalorder %s20, 3
      %p111 = por %p109, %p110
      %p113 = scmp.ne.s32.totalorder %s96, %s112
      %p114 = scmp.eq.s32.totalorder %s20, 0
      %p115 = por %p113, %p114
      %p116 = scmp.le.s32.totalorder 1, %s14
      %p117 = scmp.lt.s32.totalorder %s14, 5
      %p118 = pnand %p116, %p117
      %p119 = pneg %p118
      // Predicated region
      $region9: #{tpu_custom_call.1} parent=5 // pred_check
        _
      $region10: #{tpu_custom_call.1} parent=5 // pred_check_branch
        %121 = sbr.rel (%p118) target = $region12
      $region11: #{tpu_custom_call.1} parent=5 // pred_region
        %s122 = ssub.s32 %s14, 1
        // Predicated region
        $region13: #{tpu_custom_call.1} parent=11 // pred_check
          %p123 = pneg %p35
        $region14: #{tpu_custom_call.1} parent=11 // pred_check_branch
          %125 = sbr.rel (%p123) target = $region16
        $region15: #{tpu_custom_call.1} parent=11 // pred_region
          %s127 = ssub.s32 128, 128
          %128 = vsyncadd [#allocation3], %s127
          %s130 = sshll.u32 [#allocation2], 4
          %s131 = int_to_ptr.vmem [resolvable:$true] %s130
          %133 = dma.hbm_to_vmem [thread:$0]  %s0, 128, %s131, [#allocation3]
        $region16: #{tpu_custom_call.1} parent=11 // pred_fallthru
          _
        // Predicated region
        $region17: #{tpu_custom_call.1} parent=11 // pred_check
          %p134 = pneg %p56
        $region18: #{tpu_custom_call.1} parent=11 // pred_check_branch
          %136 = sbr.rel (%p134) target = $region20
        $region19: #{tpu_custom_call.1} parent=11 // pred_region
          %s138 = ssub.s32 32, 32
          %139 = vsyncadd [#allocation6], %s138
          %s141 = sshll.u32 [#allocation5], 4
          %s142 = int_to_ptr.vmem [resolvable:$true] %s141
          %144 = dma.hbm_to_vmem [thread:$0]  %s1, 32, %s142, [#allocation6]
        $region20: #{tpu_custom_call.1} parent=11 // pred_fallthru
          _
      $region12: #{tpu_custom_call.1} parent=5 // pred_fallthru
        _
      %p145 = scmp.lt.s32.totalorder %s14, 4
      // Predicated region
      $region21: #{tpu_custom_call.1} parent=5 // pred_check
        %p146 = pneg %p145
      $region22: #{tpu_custom_call.1} parent=5 // pred_check_branch
        %148 = sbr.rel (%p146) target = $region24
      $region23: #{tpu_custom_call.1} parent=5 // pred_region
        // Predicated region
        $region25: #{tpu_custom_call.1} parent=23 // pred_check
          %p149 = pneg %p76
        $region26: #{tpu_custom_call.1} parent=23 // pred_check_branch
          %151 = sbr.rel (%p149) target = $region28
        $region27: #{tpu_custom_call.1} parent=23 // pred_region
          %s152 = sand.u32 %s14, 1
          %s153 = scalar_lea.sflag [#allocation3], %s152
          %s154 = sand.u32 %s66, 1
          %s155 = smul.addr %s154, 32
          %s156 = scalar_lea.vmem [#allocation7], %s155
          %s158 = ssub.s32 512, 512
          %159 = vsyncadd %s153, %s158
          %s160 = smul.addr %s14, 4
          %s161 = smul.addr %s160, 128
          %s162 = scalar_lea.hbm %s2, %s161
          %s163 = sshll.u32 %s156, 4
          %s164 = int_to_ptr.vmem [resolvable:$true] %s163
          %169 = dma.hbm_to_vmem [thread:$0]  %s162, 512, %s164, %s153, 128, 128, 8
        $region28: #{tpu_custom_call.1} parent=23 // pred_fallthru
          _
      $region24: #{tpu_custom_call.1} parent=5 // pred_fallthru
        _
      %p170 = scmp.le.s32.totalorder 1, %s14
      %p171 = scmp.lt.s32.totalorder %s14, 5
      %p172 = pnand %p170, %p171
      %p173 = pneg %p172
      // Predicated region
      $region29: #{tpu_custom_call.1} parent=5 // pred_check
        _
      $region30: #{tpu_custom_call.1} parent=5 // pred_check_branch
        %175 = sbr.rel (%p172) target = $region32
      $region31: #{tpu_custom_call.1} parent=5 // pred_region
        %s176 = ssub.s32 %s14, 1
        // Predicated region
        $region33: #{tpu_custom_call.1} parent=31 // pred_check
          %p177 = pneg %p35
        $region34: #{tpu_custom_call.1} parent=31 // pred_check_branch
          %179 = sbr.rel (%p177) target = $region36
        $region35: #{tpu_custom_call.1} parent=31 // pred_region
          %180 = dma.done [#allocation3], 128
        $region36: #{tpu_custom_call.1} parent=31 // pred_fallthru
          _
        // Predicated region
        $region37: #{tpu_custom_call.1} parent=31 // pred_check
          %p181 = pneg %p56
        $region38: #{tpu_custom_call.1} parent=31 // pred_check_branch
          %183 = sbr.rel (%p181) target = $region40
        $region39: #{tpu_custom_call.1} parent=31 // pred_region
          %184 = dma.done [#allocation6], 32
        $region40: #{tpu_custom_call.1} parent=31 // pred_fallthru
          _
        %s185 = sand.u32 %s19, 1
        %s186 = scalar_lea.sflag [#allocation3], %s185
        %s187 = sand.u32 %s69, 1
        %s188 = smul.addr %s187, 32
        %s189 = scalar_lea.vmem [#allocation7], %s188
        // Predicated region
        $region41: #{tpu_custom_call.1} parent=31 // pred_check
          %p190 = pneg %p82
        $region42: #{tpu_custom_call.1} parent=31 // pred_check_branch
          %192 = sbr.rel (%p190) target = $region44
        $region43: #{tpu_custom_call.1} parent=31 // pred_region
          %193 = dma.done %s186, 512
        $region44: #{tpu_custom_call.1} parent=31 // pred_fallthru
          _
        %p194 = pneg %p35
        %p195 = pneg %p32
        %p196 = pneg %p56
        %p197 = pneg %p53
        %s198 = sand.u32 %s19, 1
        %s199 = scalar_lea.sflag [#allocation3], %s198
        %s200 = sand.u32 %s69, 1
        %s201 = smul.addr %s200, 32
        %s202 = scalar_lea.vmem [#allocation7], %s201
        %p203 = pneg %p82
        %p204 = pneg %p79
        %p205 = pneg %p108
        %p206 = pneg %p105
        %s207 = sand.u32 %s95, 1
        %s208 = scalar_lea.sflag [#allocation4], %s207
        %s209 = sand.u32 %s95, 1
        %s210 = smul.addr %s209, 8
        %s211 = scalar_lea.vmem [#allocation8], %s210
        %v214 = vld [vmem:[#allocation2] sm:$0xff]
        %v215 = vld [vmem:[#allocation5] sm:$0x3]
        %vm216 = vnez %v215
        %v217 = vld [vmem:[%s189] sm:$0xff]
        %v218 = vld [vmem:[%s189 + $0x8] sm:$0xff]
        %v219 = vld [vmem:[%s189 + $0x10] sm:$0xff]
        %v220 = vld [vmem:[%s189 + $0x18] sm:$0xff]
        %vm221 = vcmask 261120
        %v223 = vsel %vm221, %v214, 0
        %225 = vmatprep.subr.mxu0 0.0
        %226 = vmatpush1.msra.mxu0 0.0
        %227 = vmatprep.subr.mxu0 0.0
        %228 = vmatpush1.msra.mxu0 0.0
        %229 = vmatprep.subr.mxu0 0.0
        %230 = vmatpush1.msra.mxu0 0.0
        %231 = vmatprep.subr.mxu0 0.0
        %232 = vmatpush1.msra.mxu0 0.0
        %233 = vmatprep.subr.mxu0 0.0
        %234 = vmatpush1.msra.mxu0 0.0
        %235 = vmatprep.subr.mxu0 0.0
        %236 = vmatpush1.msra.mxu0 0.0
        %237 = vmatprep.subr.mxu0 0.0
        %238 = vmatpush1.msra.mxu0 0.0
        %239 = vmatprep.subr.mxu0 0.0
        %240 = vmatpush1.msra.mxu0 0.0
        %241 = vmatprep.subr.mxu0 0.0
        %242 = vmatpush1.msra.mxu0 0.0
        %243 = vmatprep.subr.mxu0 0.0
        %244 = vmatpush1.msra.mxu0 0.0
        %245 = vmatprep.subr.mxu0 0.0
        %246 = vmatpush1.msra.mxu0 0.0
        %247 = vmatprep.subr.mxu0 0.0
        %248 = vmatpush1.msra.mxu0 0.0
        %249 = vmatprep.subr.mxu0 0.0
        %250 = vmatpush1.msra.mxu0 %v220
        %251 = vmatprep.subr.mxu0 0.0
        %252 = vmatpush1.msra.mxu0 %v219
        %253 = vmatprep.subr.mxu0 0.0
        %254 = vmatpush1.msra.mxu0 %v218
        %255 = vmatprep.subr.mxu0 0.0
        %256 = vmatpush1.msra.mxu0 %v217
        %257 = vmatprep.subr.mxu0 0.0
        %258 = vmatpush2.msra.mxu0 0.0
        %259 = vmatprep.subr.mxu0 0.0
        %260 = vmatpush2.msra.mxu0 0.0
        %261 = vmatprep.subr.mxu0 0.0
        %262 = vmatpush2.msra.mxu0 0.0
        %263 = vmatprep.subr.mxu0 0.0
        %264 = vmatpush2.msra.mxu0 0.0
        %265 = vmatprep.subr.mxu0 0.0
        %266 = vmatpush2.msra.mxu0 0.0
        %267 = vmatprep.subr.mxu0 0.0
        %268 = vmatpush2.msra.mxu0 0.0
        %269 = vmatprep.subr.mxu0 0.0
        %270 = vmatpush2.msra.mxu0 0.0
        %271 = vmatprep.subr.mxu0 0.0
        %272 = vmatpush2.msra.mxu0 0.0
        %273 = vmatprep.subr.mxu0 0.0
        %274 = vmatpush2.msra.mxu0 0.0
        %275 = vmatprep.subr.mxu0 0.0
        %276 = vmatpush2.msra.mxu0 0.0
        %277 = vmatprep.subr.mxu0 0.0
        %278 = vmatpush2.msra.mxu0 0.0
        %279 = vmatprep.subr.mxu0 0.0
        %280 = vmatpush2.msra.mxu0 0.0
        %281 = vmatprep.subr.mxu0 0.0
        %282 = vmatpush2.msra.mxu0 0.0
        %283 = vmatprep.subr.mxu0 0.0
        %284 = vmatpush2.msra.mxu0 0.0
        %285 = vmatprep.subr.mxu0 0.0
        %286 = vmatpush2.msra.mxu0 0.0
        %287 = vmatprep.subr.mxu0 0.0
        %288 = vmatpush2.msra.mxu0 0.0
        %289 = vmatprep.mubr.f32.mxu0 0.0
        %290 = vmatmul.mubr.f32.gmra.mxu0 %v223
        %v291 = vpop.f32.mrf.mxu0
        %v292 = vadd.f32 0.0, %v291
        %v293 = vpop.f32.mrf.mxu0
        %294 = vdwg.mxu0
        %296 = vrot.lane.b32.xlu0 %v292, 64
        %v297 = vpop.permute.xlu0 %296
        %299 = vxpose.xlu0.b32.start [1/16] %v297, 128
        %300 = vxpose.xlu0.b32.cont [2/16] 0.0, 128
        %301 = vxpose.xlu0.b32.cont [3/16] 0.0, 128
        %302 = vxpose.xlu0.b32.cont [4/16] 0.0, 128
        %303 = vxpose.xlu0.b32.cont [5/16] 0.0, 128
        %304 = vxpose.xlu0.b32.cont [6/16] 0.0, 128
        %305 = vxpose.xlu0.b32.cont [7/16] 0.0, 128
        %306 = vxpose.xlu0.b32.cont [8/16] 0.0, 128
        %307 = vxpose.xlu0.b32.cont [9/16] 0.0, 128
        %308 = vxpose.xlu0.b32.cont [10/16] 0.0, 128
        %309 = vxpose.xlu0.b32.cont [11/16] 0.0, 128
        %310 = vxpose.xlu0.b32.cont [12/16] 0.0, 128
        %311 = vxpose.xlu0.b32.cont [13/16] 0.0, 128
        %312 = vxpose.xlu0.b32.cont [14/16] 0.0, 128
        %313 = vxpose.xlu0.b32.cont [15/16] 0.0, 128
        %314 = vxpose.xlu0.b32.end [16/16] 0.0, 128
        %v315 = vpop.trf.xlu0
        %v316 = vpop.trf.xlu0
        %v317 = vpop.trf.xlu0
        %v318 = vpop.trf.xlu0
        %v319 = vpop.trf.xlu0
        %v320 = vpop.trf.xlu0
        %v321 = vpop.trf.xlu0
        %v322 = vpop.trf.xlu0
        %v323 = vpop.trf.xlu0
        %v324 = vpop.trf.xlu0
        %v325 = vpop.trf.xlu0
        %v326 = vpop.trf.xlu0
        %v327 = vpop.trf.xlu0
        %v328 = vpop.trf.xlu0
        %v329 = vpop.trf.xlu0
        %v330 = vpop.trf.xlu0
        %331 = vset.pattern.permute.xlu0 65
        %332 = vperm.xlu0 %331, %v292
        %v333 = vpop.permute.xlu0 %332
        %v335 = vlaneseq
        %v336 = vshrl.u32 %v335, 7
        %v337 = vsub.s32 0, %v336
        %v338 = vrot.slane %v315, %v337
        %v339 = vadd.f32 %v333, %v338
        %vm340 = vcmp.gt.f32.partialorder %v339, 0.0
        %v341 = vmul.f32 %v339, 0.01
        %v342 = vsel %vm340, %v339, %v341
        %v343 = vsel %vm216, 16843009, 0
        %v344 = vunpack.c.0.s8 %v343
        %vm345 = vcmp.ne.s32.totalorder %v344, 0
        %v346 = vsel %vm345, %v342, -1e+30
        %vm347 = vcmask 64512
        %v348 = vsel %vm347, %v346, -inf
        %349 = vmax.xlane.f32.xlu0 %v348
        %v350 = vpop.xlane.xlu0 %349
        %v351 = vsub.f32 %v346, %v350
        %v352 = vmul.f32 %v351, 1.442695
        %v353 = vpow.pop %v352
        %v354 = vsel %vm345, %v353, 0.0
        %v355 = vsel %vm347, %v354, 0.0
        %356 = vadd.xlane.f32.xlu0 %v355
        %v357 = vpop.xlane.xlu0 %356
        %v358 = vrcp.pop %v357
        %v359 = vmul.f32 %v354, %v358
        %360 = vrot.lane.b32.xlu0 %v292, 96
        %v361 = vpop.permute.xlu0 %360
        %v364 = vsel %vm347, %v359, 0
        %366 = vmatprep.subr.mxu0 0.0
        %367 = vmatpush1.msra.mxu0 0.0
        %368 = vmatprep.subr.mxu0 0.0
        %369 = vmatpush1.msra.mxu0 0.0
        %370 = vmatprep.subr.mxu0 0.0
        %371 = vmatpush1.msra.mxu0 0.0
        %372 = vmatprep.subr.mxu0 0.0
        %373 = vmatpush1.msra.mxu0 0.0
        %374 = vmatprep.subr.mxu0 0.0
        %375 = vmatpush1.msra.mxu0 0.0
        %376 = vmatprep.subr.mxu0 0.0
        %377 = vmatpush1.msra.mxu0 0.0
        %378 = vmatprep.subr.mxu0 0.0
        %379 = vmatpush1.msra.mxu0 0.0
        %380 = vmatprep.subr.mxu0 0.0
        %381 = vmatpush1.msra.mxu0 0.0
        %382 = vmatprep.subr.mxu0 0.0
        %383 = vmatpush1.msra.mxu0 0.0
        %384 = vmatprep.subr.mxu0 0.0
        %385 = vmatpush1.msra.mxu0 0.0
        %386 = vmatprep.subr.mxu0 0.0
        %387 = vmatpush1.msra.mxu0 0.0
        %388 = vmatprep.subr.mxu0 0.0
        %389 = vmatpush1.msra.mxu0 0.0
        %390 = vmatprep.subr.mxu0 0.0
        %391 = vmatpush1.msra.mxu0 0.0
        %392 = vmatprep.subr.mxu0 0.0
        %393 = vmatpush1.msra.mxu0 0.0
        %394 = vmatprep.subr.mxu0 0.0
        %395 = vmatpush1.msra.mxu0 0.0
        %396 = vmatprep.subr.mxu0 0.0
        %397 = vmatpush1.msra.mxu0 %v361
        %398 = vmatprep.subr.mxu0 0.0
        %399 = vmatpush2.msra.mxu0 0.0
        %400 = vmatprep.subr.mxu0 0.0
        %401 = vmatpush2.msra.mxu0 0.0
        %402 = vmatprep.subr.mxu0 0.0
        %403 = vmatpush2.msra.mxu0 0.0
        %404 = vmatprep.subr.mxu0 0.0
        %405 = vmatpush2.msra.mxu0 0.0
        %406 = vmatprep.subr.mxu0 0.0
        %407 = vmatpush2.msra.mxu0 0.0
        %408 = vmatprep.subr.mxu0 0.0
        %409 = vmatpush2.msra.mxu0 0.0
        %410 = vmatprep.subr.mxu0 0.0
        %411 = vmatpush2.msra.mxu0 0.0
        %412 = vmatprep.subr.mxu0 0.0
        %413 = vmatpush2.msra.mxu0 0.0
        %414 = vmatprep.subr.mxu0 0.0
        %415 = vmatpush2.msra.mxu0 0.0
        %416 = vmatprep.subr.mxu0 0.0
        %417 = vmatpush2.msra.mxu0 0.0
        %418 = vmatprep.subr.mxu0 0.0
        %419 = vmatpush2.msra.mxu0 0.0
        %420 = vmatprep.subr.mxu0 0.0
        %421 = vmatpush2.msra.mxu0 0.0
        %422 = vmatprep.subr.mxu0 0.0
        %423 = vmatpush2.msra.mxu0 0.0
        %424 = vmatprep.subr.mxu0 0.0
        %425 = vmatpush2.msra.mxu0 0.0
        %426 = vmatprep.subr.mxu0 0.0
        %427 = vmatpush2.msra.mxu0 0.0
        %428 = vmatprep.subr.mxu0 0.0
        %429 = vmatpush2.msra.mxu0 0.0
        %430 = vmatprep.mubr.f32.mxu0 0.0
        %431 = vmatmul.mubr.f32.gmra.mxu0 %v364
        %v432 = vpop.f32.mrf.mxu0
        %v433 = vadd.f32 0.0, %v432
        %v434 = vpop.f32.mrf.mxu0
        %435 = vdwg.mxu0
        %v436 = vadd.f32 %v292, %v433
        %v437 = vmax.f32 %v436, 0.0
        %v438 = vadd.f32 %v214, %v437
        %439 = vst.msk [vmem:[%s211] sm:$0xff] %vm221, %v438
        %s440 = sand.u32 %s95, 1
        %s441 = scalar_lea.sflag [#allocation4], %s440
        %s442 = sand.u32 %s95, 1
        %s443 = smul.addr %s442, 8
        %s444 = scalar_lea.vmem [#allocation8], %s443
        // Predicated region
        $region45: #{tpu_custom_call.1} parent=31 // pred_check
          %p445 = pneg %p105
        $region46: #{tpu_custom_call.1} parent=31 // pred_check_branch
          %447 = sbr.rel (%p445) target = $region48
        $region47: #{tpu_custom_call.1} parent=31 // pred_region
          %s449 = ssub.s32 128, 128
          %450 = vsyncadd %s441, %s449
          %s451 = smul.addr %s19, 128
          %s452 = scalar_lea.hbm %s3, %s451
          %s454 = sshll.u32 %s444, 4
          %s455 = int_to_ptr.vmem [resolvable:$true] %s454
          %457 = dma.vmem_to_hbm [thread:$0]  %s455, 128, %s452, %s441
        $region48: #{tpu_custom_call.1} parent=31 // pred_fallthru
          _
      $region32: #{tpu_custom_call.1} parent=5 // pred_fallthru
        _
      %p458 = scmp.le.s32.totalorder 2, %s14
      // Predicated region
      $region49: #{tpu_custom_call.1} parent=5 // pred_check
        %p459 = pneg %p458
      $region50: #{tpu_custom_call.1} parent=5 // pred_check_branch
        %461 = sbr.rel (%p459) target = $region52
      $region51: #{tpu_custom_call.1} parent=5 // pred_region
        %s462 = ssub.s32 %s14, 2
        // Predicated region
        $region53: #{tpu_custom_call.1} parent=51 // pred_check
          %p463 = pneg %p111
        $region54: #{tpu_custom_call.1} parent=51 // pred_check_branch
          %465 = sbr.rel (%p463) target = $region56
        $region55: #{tpu_custom_call.1} parent=51 // pred_region
          %s466 = sand.u32 %s96, 1
          %s467 = scalar_lea.sflag [#allocation4], %s466
          %s468 = sand.u32 %s96, 1
          %s469 = smul.addr %s468, 8
          %s470 = scalar_lea.vmem [#allocation8], %s469
          %471 = dma.done %s467, 128
        $region56: #{tpu_custom_call.1} parent=51 // pred_fallthru
          _
      $region52: #{tpu_custom_call.1} parent=5 // pred_fallthru
        _
    $region6: #{tpu_custom_call.1} parent=1 // loop_footer
      %s18 = sadd.s32 1, %s14
    $region7: #{tpu_custom_call.1} parent=1 // loop_footer_branch
      %13 = sbr.rel target = $region3
    $region8: #{tpu_custom_call.1} parent=1 // loop_exit
      _
    %472 = vsyncpa [#allocation3], 1
    %s473 = scalar_lea.sflag [#allocation3], 1
    %474 = vsyncpa %s473, 1
    %475 = vsyncpa [#allocation6], 1
    %476 = vsyncpa [#allocation4], 1
    %s477 = scalar_lea.sflag [#allocation4], 1
    %478 = vsyncpa %s477, 1

</llo_original>
